<compile_context>
chip_gen: v5e
topology: v5e:2x2
jax: 0.10.0
libtpu: 0.0.40
codegen_flags: <defaults>
</compile_context>

<pallas_src>
import math

import jax
import jax.numpy as jnp
import numpy as np
from jax.experimental import pallas as pl
from jax.experimental.pallas import tpu as pltpu


def next_power_of_2(x):
    return 1 if x == 0 else 2 ** math.ceil(math.log2(x))


# ---------------- GanConfig fields used by the module (small synthetic config) ----
GAN_CONFIG = dict(
    dictionary_size=16,
    dis_emb_size=8,
    dis_hidden_1_size=8,
    dis_hidden_2_size=8,
    dis_maxpool_reduction=4,   # -> 2 maxpools
    max_sentence_length=16,
)


# ---------------- deterministic parameter construction -----------------------------
def init_params(key, cfg):
    V = cfg["dictionary_size"]
    E = cfg["dis_emb_size"]
    H1 = cfg["dis_hidden_1_size"]
    num_maxpools = int(math.log2(cfg["dis_maxpool_reduction"]))
    cpm = next_power_of_2(cfg["dis_hidden_2_size"] // num_maxpools)
    L = cfg["max_sentence_length"]
    dense_in = cpm * L // cfg["dis_maxpool_reduction"]

    keys = jax.random.split(key, 4 + 2 * (num_maxpools + 1))
    ki = iter(keys)

    # Embedding: xavier_uniform_
    bound = math.sqrt(6.0 / (V + E))
    emb = jax.random.uniform(next(ki), (V, E), jnp.float32, -bound, bound)

    # conv channel plan (mirrors the module's `channels` list)
    channels = [(E, H1)]
    for _ in range(num_maxpools):
        channels.append((channels[-1][1], cpm))

    convs = []
    for (cin, cout) in channels:
        b = 1.0 / math.sqrt(cin * 3)
        w = jax.random.uniform(next(ki), (cout, cin, 3), jnp.float32, -b, b)
        bias = jax.random.uniform(next(ki), (cout,), jnp.float32, -b, b)
        convs.append((w, bias))

    b = 1.0 / math.sqrt(dense_in)
    dense_w = jax.random.uniform(next(ki), (1, dense_in), jnp.float32, -b, b)
    dense_b = jax.random.uniform(next(ki), (1,), jnp.float32, -b, b)

    return dict(emb=emb, convs=convs, dense_w=dense_w, dense_b=dense_b,
                num_maxpools=num_maxpools, cpm=cpm, dense_in=dense_in)


# ---------------- Pallas kernel -----------------------------------------------------
def make_kernel(num_convs, L, M):
    f32 = jnp.float32
    bf16 = jnp.bfloat16

    def kernel(*refs):
        it = iter(refs)
        x_ref = next(it)                                       # (V, M) f32
        conv_refs = [[next(it) for _ in range(4)] for _ in range(num_convs)]   # w_t-d, w_t, w_t+d, bias
        mask_refs = [[next(it) for _ in range(2)] for _ in range(num_convs)]   # prev / next boundary masks
        dw_ref = next(it)                                      # (cpm, M) scattered dense weight
        sseg_ref = next(it)                                    # (M, Bt) per-sentence selector
        db_ref = next(it)                                      # (1, 1) dense bias
        out_ref = next(it)                                     # (1, Bt)

        h = x_ref[...]                                         # layer-0 input (emb folded into conv0)
        d = 1                                                  # current time dilation: 1, 2, 4, ...
        for i in range(num_convs):
            wp_ref, wm_ref, wn_ref, b_ref = conv_refs[i]
            mprev = mask_refs[i][0][...]                       # (1, M) 0/1 — zero cross-sentence t-d
            mnext = mask_refs[i][1][...]                       # (1, M) 0/1 — zero cross-sentence t+d
            # "same"-padded 3-tap conv at dilation d: neighbours via XLU lane rolls + mask,
            # then three tiny accumulated bf16 MXU dots (f32 accumulation).
            h_prev = pltpu.roll(h, d, 1) * mprev
            h_next = pltpu.roll(h, M - d, 1) * mnext
            acc = jnp.dot(wm_ref[...], h.astype(bf16), preferred_element_type=f32)
            acc += jnp.dot(wp_ref[...], h_prev.astype(bf16), preferred_element_type=f32)
            acc += jnp.dot(wn_ref[...], h_next.astype(bf16), preferred_element_type=f32)
            acc += b_ref[...]                                  # (Cout, 1) bias, f32
            h = jnp.maximum(acc, 0.1 * acc)                    # utils.LReluCustom(leak=0.1), f32

            if i < num_convs - 1:
                # MaxPool1d(2, 2): pooled values land on lanes with tpos % (2d) == 0.
                # Other lanes become dead filler that never feeds a valid lane again.
                h = jnp.maximum(h, pltpu.roll(h, M - d, 1))
                d *= 2

        # Dense head: dw is the nn.Linear weight scattered onto the dilated time grid (zeros
        # on dead lanes), so PyTorch's channel-major .view() flatten becomes an elementwise
        # multiply + per-sentence lane sums.
        p = h * dw_ref[...]                                    # (cpm, M) f32
        rs = jnp.sum(p, axis=0, keepdims=True)                 # (1, M) sublane reduce
        # Per-sentence lane segment-sum via one tiny matmul. MXU default precision; the
        # selector is exact 0/1 and the summands are O(1e-2), so rounding << test tolerance.
        pred = jnp.dot(rs, sseg_ref[...], preferred_element_type=f32)   # (1, Bt) — batch on lanes
        out_ref[...] = pred + db_ref[...]

    return kernel


def maxpool_discriminator(x, params, cfg, block_batch=None):
    B, L, V = x.shape
    reduction = cfg["dis_maxpool_reduction"]
    num_convs = params["num_maxpools"] + 1
    cpm = params["cpm"]
    L_red = L // reduction

    # Dilated-row scheme invariants (pool rolls must stay inside a sentence for valid lanes).
    assert reduction == 2 ** params["num_maxpools"], "reduction must be a power of two"
    assert L % reduction == 0, "max_sentence_length must be divisible by dis_maxpool_reduction"
    assert cpm * L_red == params["dense_in"]

    # Pad batch so the lane axis (B_pad * L) is a multiple of 128 -> lane-dense vregs and
    # unmasked stores.  Padded sentences are all-zero (NOT valid softmax rows); their outputs
    # are computed but sliced off below — never reuse the padded activations.
    pad_unit = max(1, 128 // math.gcd(L, 128))
    if block_batch is None:
        B_pad = ((B + pad_unit - 1) // pad_unit) * pad_unit
        Bt = B_pad                        # whole batch in ONE grid step (overhead-bound regime)
    else:
        Bt = block_batch                  # optional lane-blocking for very large batches
        B_pad = ((B + Bt - 1) // Bt) * Bt
        if B_pad // Bt > 1:
            assert (Bt * L) % 128 == 0, "batch block must give a 128-multiple lane width"
    nb = B_pad // Bt
    M = Bt * L                            # lanes per grid step (batch*time on the lane axis)

    if B_pad != B:
        x = jnp.concatenate([x, jnp.zeros((B_pad - B, L, V), x.dtype)], axis=0)
    # channels-on-sublanes / (batch*time)-on-lanes layout: x -> (V, B_pad*L), f32
    xT = x.reshape(B_pad * L, V).T.astype(jnp.float32)

    emb = np.asarray(params["emb"], np.float32)                 # (V, E)

    def const(shape):
        return pl.BlockSpec(shape, lambda bi: (0, 0))           # VMEM-resident across the grid

    # Per-conv tap weights (embedding folded into conv0) + biases.
    conv_inputs, conv_specs = [], []
    for i, (w, b) in enumerate(params["convs"]):
        w = np.asarray(w, np.float32)                            # (Cout, Cin, 3)
        for k in range(3):                                       # tap k: 0 -> t-d, 1 -> t, 2 -> t+d
            if i == 0:
                wk = w[:, :, k] @ emb.T                          # fold embedding: (H1, V)
            else:
                wk = w[:, :, k]                                  # (Cout, Cin)
            wk = jnp.asarray(wk, jnp.bfloat16)
            conv_inputs.append(wk)
            conv_specs.append(const(wk.shape))
        bk = jnp.asarray(np.asarray(b, np.float32)[:, None])     # (Cout, 1)
        conv_inputs.append(bk)
        conv_specs.append(const(bk.shape))

    # Host-built constants: per-dilation sentence-boundary masks, dense-weight scatter and
    # per-sentence segment-sum selector (instead of per-step iota chains in the kernel).
    tpos = np.arange(M) % L
    mask_inputs, mask_specs = [], []
    d = 1
    for i in range(num_convs):
        mprev = (tpos >= d).astype(np.float32)[None, :]          # zero t-d across sentence start
        mnext = (tpos < L - d).astype(np.float32)[None, :]       # zero t+d across sentence end
        mask_inputs += [jnp.asarray(mprev), jnp.asarray(mnext)]
        mask_specs += [const((1, M)), const((1, M))]
        if i < num_convs - 1:
            d *= 2

    # nn.Linear weight (1, cpm*L_red) is channel-major; scatter onto the dilated time grid
    # (lane reduction*t holds pooled position t, dead lanes get 0) and tile over Bt sentences.
    dwc = np.asarray(params["dense_w"], np.float32).reshape(cpm, L_red)
    dw_sent = np.zeros((cpm, L), np.float32)
    dw_sent[:, ::reduction] = dwc
    dw = jnp.asarray(np.tile(dw_sent, (1, Bt)))                  # (cpm, M)

    sseg = (np.arange(M)[:, None] // L ==
            np.arange(Bt)[None, :]).astype(np.float32)           # (M, Bt) 0/1 selector
    sseg = jnp.asarray(sseg)
    db = jnp.asarray(np.asarray(params["dense_b"], np.float32).reshape(1, 1))

    in_specs = ([pl.BlockSpec((V, M), lambda bi: (0, bi))]
                + conv_specs + mask_specs
                + [const(dw.shape), const(sseg.shape), const(db.shape)])

    out = pl.pallas_call(
        make_kernel(num_convs, L, M),
        out_shape=jax.ShapeDtypeStruct((1, B_pad), jnp.float32),
        grid_spec=pltpu.PrefetchScalarGridSpec(
            num_scalar_prefetch=0,
            grid=(nb,),
            in_specs=in_specs,
            out_specs=pl.BlockSpec((1, Bt), lambda bi: (0, bi)),
        ),
        # Single step for small batches: megacore split only pays when each TensorCore gets
        # substantial per-step work (use block_batch for very large B).
        compiler_params=pltpu.CompilerParams(
            dimension_semantics=(("parallel",) if nb > 1 else ("arbitrary",))),
    )(xT, *conv_inputs, *mask_inputs, dw, sseg, db)

    return out.reshape(B_pad, 1)[:B]


# ---------------- pure-JAX reference (for correctness check) -----------------------
def reference_forward(x, params):
    # Matches the PyTorch module op order; matmul/conv inputs are rounded to bf16 like the
    # kernel's MXU inputs (f32 accumulation).
    bf16, f32 = jnp.bfloat16, jnp.float32
    h = jnp.einsum("blv,ve->ble", x.astype(bf16), params["emb"].astype(bf16),
                   preferred_element_type=f32)
    h = jnp.transpose(h, (0, 2, 1))                     # (B, C, L), NCL like PyTorch

    def conv1d(h, w, b):
        out = jax.lax.conv_general_dilated(
            h.astype(bf16), w.astype(bf16), window_strides=(1,), padding=((1, 1),),
            dimension_numbers=("NCH", "OIH", "NCH"),
            preferred_element_type=f32)
        return out + b[None, :, None]

    def lrelu(h):
        return jnp.maximum(h, 0.1 * h)

    def maxpool(h):
        B, C, L = h.shape
        return jnp.max(h.reshape(B, C, L // 2, 2), axis=-1)

    convs = params["convs"]
    h = lrelu(conv1d(h, *convs[0]))
    for (w, b) in convs[1:]:
        h = maxpool(h)
        h = lrelu(conv1d(h, w, b))
    B = h.shape[0]
    flat = h.reshape(B, -1)
    pred = jnp.dot(flat, params["dense_w"].T,
                   precision=jax.lax.Precision.HIGHEST)
    return pred + params["dense_b"][None, :]


if __name__ == "__main__":
    cfg = GAN_CONFIG
    key = jax.random.PRNGKey(0)
    pkey, xkey = jax.random.split(key)
    params = init_params(pkey, cfg)

    B = 16
    L = cfg["max_sentence_length"]
    V = cfg["dictionary_size"]
    # x is a (batch, phrase_length, dictionary_size) soft symbol distribution
    x = jax.nn.softmax(jax.random.normal(xkey, (B, L, V), jnp.float32), axis=-1)

    pred = maxpool_discriminator(x, params, cfg)
    pred = jax.block_until_ready(pred)

    ref = reference_forward(x, params)
    # The kernel folds the embedding into conv0 and feeds the MXU bf16 inputs, so its
    # rounding points differ slightly from the reference's; tolerance sits ~10x above the
    # expected bf16-level drift and far below a genuine wiring error (outputs are O(0.1)).
    np.testing.assert_allclose(np.asarray(pred), np.asarray(ref), rtol=2e-2, atol=3e-3)
    print("KERNEL_OK")
</pallas_src>

<mosaic_0001>
module attributes {stable_mosaic.version = 11 : i64} {
  func.func @kernel(%arg0: i32, %arg1: memref<16x256xf32, #tpu.memory_space<vmem>>, %arg2: memref<8x16xbf16, #tpu.memory_space<vmem>>, %arg3: memref<8x16xbf16, #tpu.memory_space<vmem>>, %arg4: memref<8x16xbf16, #tpu.memory_space<vmem>>, %arg5: memref<8x1xf32, #tpu.memory_space<vmem>>, %arg6: memref<4x8xbf16, #tpu.memory_space<vmem>>, %arg7: memref<4x8xbf16, #tpu.memory_space<vmem>>, %arg8: memref<4x8xbf16, #tpu.memory_space<vmem>>, %arg9: memref<4x1xf32, #tpu.memory_space<vmem>>, %arg10: memref<4x4xbf16, #tpu.memory_space<vmem>>, %arg11: memref<4x4xbf16, #tpu.memory_space<vmem>>, %arg12: memref<4x4xbf16, #tpu.memory_space<vmem>>, %arg13: memref<4x1xf32, #tpu.memory_space<vmem>>, %arg14: memref<1x256xf32, #tpu.memory_space<vmem>>, %arg15: memref<1x256xf32, #tpu.memory_space<vmem>>, %arg16: memref<1x256xf32, #tpu.memory_space<vmem>>, %arg17: memref<1x256xf32, #tpu.memory_space<vmem>>, %arg18: memref<1x256xf32, #tpu.memory_space<vmem>>, %arg19: memref<1x256xf32, #tpu.memory_space<vmem>>, %arg20: memref<4x256xf32, #tpu.memory_space<vmem>>, %arg21: memref<256x16xf32, #tpu.memory_space<vmem>>, %arg22: memref<1x1xf32, #tpu.memory_space<vmem>>, %arg23: memref<1x16xf32, #tpu.memory_space<vmem>>) attributes {dimension_semantics = [#tpu.dimension_semantics<arbitrary>], iteration_bounds = array<i64: 1>, scalar_prefetch = 0 : i64, scratch_operands = 0 : i64, tpu.core_type = #tpu.core_type<tc>, window_params = [{transform_indices = @transform_0, window_bounds = array<i64: 16, 256>}, {pipeline_mode = #tpu.pipeline_mode<synchronous>, transform_indices = @transform_1, window_bounds = array<i64: 8, 16>}, {pipeline_mode = #tpu.pipeline_mode<synchronous>, transform_indices = @transform_2, window_bounds = array<i64: 8, 16>}, {pipeline_mode = #tpu.pipeline_mode<synchronous>, transform_indices = @transform_3, window_bounds = array<i64: 8, 16>}, {pipeline_mode = #tpu.pipeline_mode<synchronous>, transform_indices = @transform_4, window_bounds = array<i64: 8, 1>}, {pipeline_mode = #tpu.pipeline_mode<synchronous>, transform_indices = @transform_5, window_bounds = array<i64: 4, 8>}, {pipeline_mode = #tpu.pipeline_mode<synchronous>, transform_indices = @transform_6, window_bounds = array<i64: 4, 8>}, {pipeline_mode = #tpu.pipeline_mode<synchronous>, transform_indices = @transform_7, window_bounds = array<i64: 4, 8>}, {pipeline_mode = #tpu.pipeline_mode<synchronous>, transform_indices = @transform_8, window_bounds = array<i64: 4, 1>}, {pipeline_mode = #tpu.pipeline_mode<synchronous>, transform_indices = @transform_9, window_bounds = array<i64: 4, 4>}, {pipeline_mode = #tpu.pipeline_mode<synchronous>, transform_indices = @transform_10, window_bounds = array<i64: 4, 4>}, {pipeline_mode = #tpu.pipeline_mode<synchronous>, transform_indices = @transform_11, window_bounds = array<i64: 4, 4>}, {pipeline_mode = #tpu.pipeline_mode<synchronous>, transform_indices = @transform_12, window_bounds = array<i64: 4, 1>}, {pipeline_mode = #tpu.pipeline_mode<synchronous>, transform_indices = @transform_13, window_bounds = array<i64: 1, 256>}, {pipeline_mode = #tpu.pipeline_mode<synchronous>, transform_indices = @transform_14, window_bounds = array<i64: 1, 256>}, {pipeline_mode = #tpu.pipeline_mode<synchronous>, transform_indices = @transform_15, window_bounds = array<i64: 1, 256>}, {pipeline_mode = #tpu.pipeline_mode<synchronous>, transform_indices = @transform_16, window_bounds = array<i64: 1, 256>}, {pipeline_mode = #tpu.pipeline_mode<synchronous>, transform_indices = @transform_17, window_bounds = array<i64: 1, 256>}, {pipeline_mode = #tpu.pipeline_mode<synchronous>, transform_indices = @transform_18, window_bounds = array<i64: 1, 256>}, {pipeline_mode = #tpu.pipeline_mode<synchronous>, transform_indices = @transform_19, window_bounds = array<i64: 4, 256>}, {pipeline_mode = #tpu.pipeline_mode<synchronous>, transform_indices = @transform_20, window_bounds = array<i64: 256, 16>}, {pipeline_mode = #tpu.pipeline_mode<synchronous>, transform_indices = @transform_21, window_bounds = array<i64: 1, 1>}, {transform_indices = @transform_22, window_bounds = array<i64: 1, 16>}]} {
    %c0 = arith.constant 0 : index
    %c0_0 = arith.constant 0 : index
    %0 = vector.load %arg1[%c0, %c0_0] : memref<16x256xf32, #tpu.memory_space<vmem>>, vector<16x256xf32>
    %c0_1 = arith.constant 0 : index
    %c0_2 = arith.constant 0 : index
    %1 = vector.load %arg14[%c0_1, %c0_2] : memref<1x256xf32, #tpu.memory_space<vmem>>, vector<1x256xf32>
    %c0_3 = arith.constant 0 : index
    %c0_4 = arith.constant 0 : index
    %2 = vector.load %arg15[%c0_3, %c0_4] : memref<1x256xf32, #tpu.memory_space<vmem>>, vector<1x256xf32>
    %c1_i32 = arith.constant 1 : i32
    %3 = tpu.dynamic_rotate %0 by %c1_i32 dim 1 : vector<16x256xf32>, i32 -> vector<16x256xf32>
    %4 = vector.broadcast %1 : vector<1x256xf32> to vector<16x256xf32>
    %5 = arith.mulf %3, %4 : vector<16x256xf32>
    %c255_i32 = arith.constant 255 : i32
    %6 = tpu.dynamic_rotate %0 by %c255_i32 dim 1 : vector<16x256xf32>, i32 -> vector<16x256xf32>
    %7 = vector.broadcast %2 : vector<1x256xf32> to vector<16x256xf32>
    %8 = arith.mulf %6, %7 : vector<16x256xf32>
    %c0_5 = arith.constant 0 : index
    %c0_6 = arith.constant 0 : index
    %9 = vector.load %arg3[%c0_5, %c0_6] : memref<8x16xbf16, #tpu.memory_space<vmem>>, vector<8x16xbf16>
    %10 = arith.truncf %0 : vector<16x256xf32> to vector<16x256xbf16>
    %cst = arith.constant dense<0.000000e+00> : vector<8x256xf32>
    %11 = tpu.matmul %9, %10, %cst {dimension_numbers = #tpu.dot_dimension_numbers<[1], [0], [0], [1], [0, 0, 1, 1], [], []>} : vector<8x16xbf16>, vector<16x256xbf16>, vector<8x256xf32> -> vector<8x256xf32>
    %c0_7 = arith.constant 0 : index
    %c0_8 = arith.constant 0 : index
    %12 = vector.load %arg2[%c0_7, %c0_8] : memref<8x16xbf16, #tpu.memory_space<vmem>>, vector<8x16xbf16>
    %13 = arith.truncf %5 : vector<16x256xf32> to vector<16x256xbf16>
    %cst_9 = arith.constant dense<0.000000e+00> : vector<8x256xf32>
    %14 = tpu.matmul %12, %13, %cst_9 {dimension_numbers = #tpu.dot_dimension_numbers<[1], [0], [0], [1], [0, 0, 1, 1], [], []>} : vector<8x16xbf16>, vector<16x256xbf16>, vector<8x256xf32> -> vector<8x256xf32>
    %15 = arith.addf %11, %14 : vector<8x256xf32>
    %c0_10 = arith.constant 0 : index
    %c0_11 = arith.constant 0 : index
    %16 = vector.load %arg4[%c0_10, %c0_11] : memref<8x16xbf16, #tpu.memory_space<vmem>>, vector<8x16xbf16>
    %17 = arith.truncf %8 : vector<16x256xf32> to vector<16x256xbf16>
    %cst_12 = arith.constant dense<0.000000e+00> : vector<8x256xf32>
    %18 = tpu.matmul %16, %17, %cst_12 {dimension_numbers = #tpu.dot_dimension_numbers<[1], [0], [0], [1], [0, 0, 1, 1], [], []>} : vector<8x16xbf16>, vector<16x256xbf16>, vector<8x256xf32> -> vector<8x256xf32>
    %19 = arith.addf %15, %18 : vector<8x256xf32>
    %c0_13 = arith.constant 0 : index
    %c0_14 = arith.constant 0 : index
    %20 = vector.load %arg5[%c0_13, %c0_14] : memref<8x1xf32, #tpu.memory_space<vmem>>, vector<8x1xf32>
    %21 = vector.broadcast %20 : vector<8x1xf32> to vector<8x256xf32>
    %22 = arith.addf %19, %21 : vector<8x256xf32>
    %cst_15 = arith.constant 1.000000e-01 : f32
    %23 = vector.broadcast %cst_15 : f32 to vector<8x256xf32>
    %24 = arith.mulf %23, %22 : vector<8x256xf32>
    %25 = arith.maximumf %22, %24 : vector<8x256xf32>
    %c255_i32_16 = arith.constant 255 : i32
    %26 = tpu.dynamic_rotate %25 by %c255_i32_16 dim 1 : vector<8x256xf32>, i32 -> vector<8x256xf32>
    %27 = arith.maximumf %25, %26 : vector<8x256xf32>
    %c0_17 = arith.constant 0 : index
    %c0_18 = arith.constant 0 : index
    %28 = vector.load %arg16[%c0_17, %c0_18] : memref<1x256xf32, #tpu.memory_space<vmem>>, vector<1x256xf32>
    %c0_19 = arith.constant 0 : index
    %c0_20 = arith.constant 0 : index
    %29 = vector.load %arg17[%c0_19, %c0_20] : memref<1x256xf32, #tpu.memory_space<vmem>>, vector<1x256xf32>
    %c2_i32 = arith.constant 2 : i32
    %30 = tpu.dynamic_rotate %27 by %c2_i32 dim 1 : vector<8x256xf32>, i32 -> vector<8x256xf32>
    %31 = vector.broadcast %28 : vector<1x256xf32> to vector<8x256xf32>
    %32 = arith.mulf %30, %31 : vector<8x256xf32>
    %c254_i32 = arith.constant 254 : i32
    %33 = tpu.dynamic_rotate %27 by %c254_i32 dim 1 : vector<8x256xf32>, i32 -> vector<8x256xf32>
    %34 = vector.broadcast %29 : vector<1x256xf32> to vector<8x256xf32>
    %35 = arith.mulf %33, %34 : vector<8x256xf32>
    %c0_21 = arith.constant 0 : index
    %c0_22 = arith.constant 0 : index
    %36 = vector.load %arg7[%c0_21, %c0_22] : memref<4x8xbf16, #tpu.memory_space<vmem>>, vector<4x8xbf16>
    %37 = arith.truncf %27 : vector<8x256xf32> to vector<8x256xbf16>
    %cst_23 = arith.constant dense<0.000000e+00> : vector<4x256xf32>
    %38 = tpu.matmul %36, %37, %cst_23 {dimension_numbers = #tpu.dot_dimension_numbers<[1], [0], [0], [1], [0, 0, 1, 1], [], []>} : vector<4x8xbf16>, vector<8x256xbf16>, vector<4x256xf32> -> vector<4x256xf32>
    %c0_24 = arith.constant 0 : index
    %c0_25 = arith.constant 0 : index
    %39 = vector.load %arg6[%c0_24, %c0_25] : memref<4x8xbf16, #tpu.memory_space<vmem>>, vector<4x8xbf16>
    %40 = arith.truncf %32 : vector<8x256xf32> to vector<8x256xbf16>
    %cst_26 = arith.constant dense<0.000000e+00> : vector<4x256xf32>
    %41 = tpu.matmul %39, %40, %cst_26 {dimension_numbers = #tpu.dot_dimension_numbers<[1], [0], [0], [1], [0, 0, 1, 1], [], []>} : vector<4x8xbf16>, vector<8x256xbf16>, vector<4x256xf32> -> vector<4x256xf32>
    %42 = arith.addf %38, %41 : vector<4x256xf32>
    %c0_27 = arith.constant 0 : index
    %c0_28 = arith.constant 0 : index
    %43 = vector.load %arg8[%c0_27, %c0_28] : memref<4x8xbf16, #tpu.memory_space<vmem>>, vector<4x8xbf16>
    %44 = arith.truncf %35 : vector<8x256xf32> to vector<8x256xbf16>
    %cst_29 = arith.constant dense<0.000000e+00> : vector<4x256xf32>
    %45 = tpu.matmul %43, %44, %cst_29 {dimension_numbers = #tpu.dot_dimension_numbers<[1], [0], [0], [1], [0, 0, 1, 1], [], []>} : vector<4x8xbf16>, vector<8x256xbf16>, vector<4x256xf32> -> vector<4x256xf32>
    %46 = arith.addf %42, %45 : vector<4x256xf32>
    %c0_30 = arith.constant 0 : index
    %c0_31 = arith.constant 0 : index
    %47 = vector.load %arg9[%c0_30, %c0_31] : memref<4x1xf32, #tpu.memory_space<vmem>>, vector<4x1xf32>
    %48 = vector.broadcast %47 : vector<4x1xf32> to vector<4x256xf32>
    %49 = arith.addf %46, %48 : vector<4x256xf32>
    %cst_32 = arith.constant 1.000000e-01 : f32
    %50 = vector.broadcast %cst_32 : f32 to vector<4x256xf32>
    %51 = arith.mulf %50, %49 : vector<4x256xf32>
    %52 = arith.maximumf %49, %51 : vector<4x256xf32>
    %c254_i32_33 = arith.constant 254 : i32
    %53 = tpu.dynamic_rotate %52 by %c254_i32_33 dim 1 : vector<4x256xf32>, i32 -> vector<4x256xf32>
    %54 = arith.maximumf %52, %53 : vector<4x256xf32>
    %c0_34 = arith.constant 0 : index
    %c0_35 = arith.constant 0 : index
    %55 = vector.load %arg18[%c0_34, %c0_35] : memref<1x256xf32, #tpu.memory_space<vmem>>, vector<1x256xf32>
    %c0_36 = arith.constant 0 : index
    %c0_37 = arith.constant 0 : index
    %56 = vector.load %arg19[%c0_36, %c0_37] : memref<1x256xf32, #tpu.memory_space<vmem>>, vector<1x256xf32>
    %c4_i32 = arith.constant 4 : i32
    %57 = tpu.dynamic_rotate %54 by %c4_i32 dim 1 : vector<4x256xf32>, i32 -> vector<4x256xf32>
    %58 = vector.broadcast %55 : vector<1x256xf32> to vector<4x256xf32>
    %59 = arith.mulf %57, %58 : vector<4x256xf32>
    %c252_i32 = arith.constant 252 : i32
    %60 = tpu.dynamic_rotate %54 by %c252_i32 dim 1 : vector<4x256xf32>, i32 -> vector<4x256xf32>
    %61 = vector.broadcast %56 : vector<1x256xf32> to vector<4x256xf32>
    %62 = arith.mulf %60, %61 : vector<4x256xf32>
    %c0_38 = arith.constant 0 : index
    %c0_39 = arith.constant 0 : index
    %63 = vector.load %arg11[%c0_38, %c0_39] : memref<4x4xbf16, #tpu.memory_space<vmem>>, vector<4x4xbf16>
    %64 = arith.truncf %54 : vector<4x256xf32> to vector<4x256xbf16>
    %cst_40 = arith.constant dense<0.000000e+00> : vector<4x256xf32>
    %65 = tpu.matmul %63, %64, %cst_40 {dimension_numbers = #tpu.dot_dimension_numbers<[1], [0], [0], [1], [0, 0, 1, 1], [], []>} : vector<4x4xbf16>, vector<4x256xbf16>, vector<4x256xf32> -> vector<4x256xf32>
    %c0_41 = arith.constant 0 : index
    %c0_42 = arith.constant 0 : index
    %66 = vector.load %arg10[%c0_41, %c0_42] : memref<4x4xbf16, #tpu.memory_space<vmem>>, vector<4x4xbf16>
    %67 = arith.truncf %59 : vector<4x256xf32> to vector<4x256xbf16>
    %cst_43 = arith.constant dense<0.000000e+00> : vector<4x256xf32>
    %68 = tpu.matmul %66, %67, %cst_43 {dimension_numbers = #tpu.dot_dimension_numbers<[1], [0], [0], [1], [0, 0, 1, 1], [], []>} : vector<4x4xbf16>, vector<4x256xbf16>, vector<4x256xf32> -> vector<4x256xf32>
    %69 = arith.addf %65, %68 : vector<4x256xf32>
    %c0_44 = arith.constant 0 : index
    %c0_45 = arith.constant 0 : index
    %70 = vector.load %arg12[%c0_44, %c0_45] : memref<4x4xbf16, #tpu.memory_space<vmem>>, vector<4x4xbf16>
    %71 = arith.truncf %62 : vector<4x256xf32> to vector<4x256xbf16>
    %cst_46 = arith.constant dense<0.000000e+00> : vector<4x256xf32>
    %72 = tpu.matmul %70, %71, %cst_46 {dimension_numbers = #tpu.dot_dimension_numbers<[1], [0], [0], [1], [0, 0, 1, 1], [], []>} : vector<4x4xbf16>, vector<4x256xbf16>, vector<4x256xf32> -> vector<4x256xf32>
    %73 = arith.addf %69, %72 : vector<4x256xf32>
    %c0_47 = arith.constant 0 : index
    %c0_48 = arith.constant 0 : index
    %74 = vector.load %arg13[%c0_47, %c0_48] : memref<4x1xf32, #tpu.memory_space<vmem>>, vector<4x1xf32>
    %75 = vector.broadcast %74 : vector<4x1xf32> to vector<4x256xf32>
    %76 = arith.addf %73, %75 : vector<4x256xf32>
    %cst_49 = arith.constant 1.000000e-01 : f32
    %77 = vector.broadcast %cst_49 : f32 to vector<4x256xf32>
    %78 = arith.mulf %77, %76 : vector<4x256xf32>
    %79 = arith.maximumf %76, %78 : vector<4x256xf32>
    %c0_50 = arith.constant 0 : index
    %c0_51 = arith.constant 0 : index
    %80 = vector.load %arg20[%c0_50, %c0_51] : memref<4x256xf32, #tpu.memory_space<vmem>>, vector<4x256xf32>
    %81 = arith.mulf %79, %80 : vector<4x256xf32>
    %cst_52 = arith.constant dense<0.000000e+00> : vector<256xf32>
    %82 = vector.multi_reduction <add>, %81, %cst_52 [0] : vector<4x256xf32> to vector<256xf32>
    %83 = vector.shape_cast %82 : vector<256xf32> to vector<1x256xf32>
    %c0_53 = arith.constant 0 : index
    %c0_54 = arith.constant 0 : index
    %84 = vector.load %arg21[%c0_53, %c0_54] : memref<256x16xf32, #tpu.memory_space<vmem>>, vector<256x16xf32>
    %cst_55 = arith.constant dense<0.000000e+00> : vector<1x16xf32>
    %85 = tpu.matmul %83, %84, %cst_55 {dimension_numbers = #tpu.dot_dimension_numbers<[1], [0], [0], [1], [0, 0, 1, 1], [], []>} : vector<1x256xf32>, vector<256x16xf32>, vector<1x16xf32> -> vector<1x16xf32>
    %c0_56 = arith.constant 0 : index
    %c0_57 = arith.constant 0 : index
    %86 = vector.load %arg22[%c0_56, %c0_57] : memref<1x1xf32, #tpu.memory_space<vmem>>, vector<1x1xf32>
    %87 = vector.broadcast %86 : vector<1x1xf32> to vector<1x16xf32>
    %88 = arith.addf %85, %87 : vector<1x16xf32>
    %c0_58 = arith.constant 0 : index
    %c0_59 = arith.constant 0 : index
    %89 = vector.load %arg23[%c0_58, %c0_59] : memref<1x16xf32, #tpu.memory_space<vmem>>, vector<1x16xf32>
    tpu.vector_store %arg23[%c0_58, %c0_59], %88 {strides = array<i32>} : memref<1x16xf32, #tpu.memory_space<vmem>>, vector<1x16xf32>,
    return
  }
  func.func @transform_0(%arg0: i32) -> (i32, i32) {
    %c0_i32 = arith.constant 0 : i32
    %c0_i32_0 = arith.constant 0 : i32
    return %c0_i32, %arg0 : i32, i32
  }
  func.func @transform_1(%arg0: i32) -> (i32, i32) {
    %c0_i32 = arith.constant 0 : i32
    %c0_i32_0 = arith.constant 0 : i32
    %c0_i32_1 = arith.constant 0 : i32
    return %c0_i32, %c0_i32_0 : i32, i32
  }
  func.func @transform_2(%arg0: i32) -> (i32, i32) {
    %c0_i32 = arith.constant 0 : i32
    %c0_i32_0 = arith.constant 0 : i32
    %c0_i32_1 = arith.constant 0 : i32
    return %c0_i32, %c0_i32_0 : i32, i32
  }
  func.func @transform_3(%arg0: i32) -> (i32, i32) {
    %c0_i32 = arith.constant 0 : i32
    %c0_i32_0 = arith.constant 0 : i32
    %c0_i32_1 = arith.constant 0 : i32
    return %c0_i32, %c0_i32_0 : i32, i32
  }
  func.func @transform_4(%arg0: i32) -> (i32, i32) {
    %c0_i32 = arith.constant 0 : i32
    %c0_i32_0 = arith.constant 0 : i32
    %c0_i32_1 = arith.constant 0 : i32
    return %c0_i32, %c0_i32_0 : i32, i32
  }
  func.func @transform_5(%arg0: i32) -> (i32, i32) {
    %c0_i32 = arith.constant 0 : i32
    %c0_i32_0 = arith.constant 0 : i32
    %c0_i32_1 = arith.constant 0 : i32
    return %c0_i32, %c0_i32_0 : i32, i32
  }
  func.func @transform_6(%arg0: i32) -> (i32, i32) {
    %c0_i32 = arith.constant 0 : i32
    %c0_i32_0 = arith.constant 0 : i32
    %c0_i32_1 = arith.constant 0 : i32
    return %c0_i32, %c0_i32_0 : i32, i32
  }
  func.func @transform_7(%arg0: i32) -> (i32, i32) {
    %c0_i32 = arith.constant 0 : i32
    %c0_i32_0 = arith.constant 0 : i32
    %c0_i32_1 = arith.constant 0 : i32
    return %c0_i32, %c0_i32_0 : i32, i32
  }
  func.func @transform_8(%arg0: i32) -> (i32, i32) {
    %c0_i32 = arith.constant 0 : i32
    %c0_i32_0 = arith.constant 0 : i32
    %c0_i32_1 = arith.constant 0 : i32
    return %c0_i32, %c0_i32_0 : i32, i32
  }
  func.func @transform_9(%arg0: i32) -> (i32, i32) {
    %c0_i32 = arith.constant 0 : i32
    %c0_i32_0 = arith.constant 0 : i32
    %c0_i32_1 = arith.constant 0 : i32
    return %c0_i32, %c0_i32_0 : i32, i32
  }
  func.func @transform_10(%arg0: i32) -> (i32, i32) {
    %c0_i32 = arith.constant 0 : i32
    %c0_i32_0 = arith.constant 0 : i32
    %c0_i32_1 = arith.constant 0 : i32
    return %c0_i32, %c0_i32_0 : i32, i32
  }
  func.func @transform_11(%arg0: i32) -> (i32, i32) {
    %c0_i32 = arith.constant 0 : i32
    %c0_i32_0 = arith.constant 0 : i32
    %c0_i32_1 = arith.constant 0 : i32
    return %c0_i32, %c0_i32_0 : i32, i32
  }
  func.func @transform_12(%arg0: i32) -> (i32, i32) {
    %c0_i32 = arith.constant 0 : i32
    %c0_i32_0 = arith.constant 0 : i32
    %c0_i32_1 = arith.constant 0 : i32
    return %c0_i32, %c0_i32_0 : i32, i32
  }
  func.func @transform_13(%arg0: i32) -> (i32, i32) {
    %c0_i32 = arith.constant 0 : i32
    %c0_i32_0 = arith.constant 0 : i32
    %c0_i32_1 = arith.constant 0 : i32
    return %c0_i32, %c0_i32_0 : i32, i32
  }
  func.func @transform_14(%arg0: i32) -> (i32, i32) {
    %c0_i32 = arith.constant 0 : i32
    %c0_i32_0 = arith.constant 0 : i32
    %c0_i32_1 = arith.constant 0 : i32
    return %c0_i32, %c0_i32_0 : i32, i32
  }
  func.func @transform_15(%arg0: i32) -> (i32, i32) {
    %c0_i32 = arith.constant 0 : i32
    %c0_i32_0 = arith.constant 0 : i32
    %c0_i32_1 = arith.constant 0 : i32
    return %c0_i32, %c0_i32_0 : i32, i32
  }
  func.func @transform_16(%arg0: i32) -> (i32, i32) {
    %c0_i32 = arith.constant 0 : i32
    %c0_i32_0 = arith.constant 0 : i32
    %c0_i32_1 = arith.constant 0 : i32
    return %c0_i32, %c0_i32_0 : i32, i32
  }
  func.func @transform_17(%arg0: i32) -> (i32, i32) {
    %c0_i32 = arith.constant 0 : i32
    %c0_i32_0 = arith.constant 0 : i32
    %c0_i32_1 = arith.constant 0 : i32
    return %c0_i32, %c0_i32_0 : i32, i32
  }
  func.func @transform_18(%arg0: i32) -> (i32, i32) {
    %c0_i32 = arith.constant 0 : i32
    %c0_i32_0 = arith.constant 0 : i32
    %c0_i32_1 = arith.constant 0 : i32
    return %c0_i32, %c0_i32_0 : i32, i32
  }
  func.func @transform_19(%arg0: i32) -> (i32, i32) {
    %c0_i32 = arith.constant 0 : i32
    %c0_i32_0 = arith.constant 0 : i32
    %c0_i32_1 = arith.constant 0 : i32
    return %c0_i32, %c0_i32_0 : i32, i32
  }
  func.func @transform_20(%arg0: i32) -> (i32, i32) {
    %c0_i32 = arith.constant 0 : i32
    %c0_i32_0 = arith.constant 0 : i32
    %c0_i32_1 = arith.constant 0 : i32
    return %c0_i32, %c0_i32_0 : i32, i32
  }
  func.func @transform_21(%arg0: i32) -> (i32, i32) {
    %c0_i32 = arith.constant 0 : i32
    %c0_i32_0 = arith.constant 0 : i32
    %c0_i32_1 = arith.constant 0 : i32
    return %c0_i32, %c0_i32_0 : i32, i32
  }
  func.func @transform_22(%arg0: i32) -> (i32, i32) {
    %c0_i32 = arith.constant 0 : i32
    %c0_i32_0 = arith.constant 0 : i32
    return %c0_i32, %arg0 : i32, i32
  }
}

</mosaic_0001>

<llo_original>
// kernel: tpu_custom_call.1
$region0: #{tpu_custom_call.1}
  #allocation0 [shape = 'u32[]', space=smem, size = 0x4, offset = 0x4, fixed_abs, tag = 'smem constant byte address 0x4 - core index']
  #allocation1 [shape = 'u32[72,128]{1,0:T(1,128)}', space=vmem, size = 0x9000, scoped, tag = 'internal scratch']
  #allocation2 [shape = 'f32[1,1]{1,0:T(1,128)S(1)}', space=vmem, size = 0x200, scoped, tag = 'scoped memory for tpu_custom_call.1']
  %s0 = inlined_call_operand.vmem [shape: f32[16,256], index: 0, kind: input, shape index: {}]
  %s1 = inlined_call_operand.vmem [shape: bf16[8,16], index: 1, kind: input, shape index: {}]
  %s2 = inlined_call_operand.vmem [shape: bf16[8,16], index: 2, kind: input, shape index: {}]
  %s3 = inlined_call_operand.vmem [shape: bf16[8,16], index: 3, kind: input, shape index: {}]
  %s4 = inlined_call_operand.vmem [shape: f32[8,1], index: 4, kind: input, shape index: {}]
  %s5 = inlined_call_operand.vmem [shape: bf16[4,8], index: 5, kind: input, shape index: {}]
  %s6 = inlined_call_operand.vmem [shape: bf16[4,8], index: 6, kind: input, shape index: {}]
  %s7 = inlined_call_operand.vmem [shape: bf16[4,8], index: 7, kind: input, shape index: {}]
  %s8 = inlined_call_operand.vmem [shape: f32[4,1], index: 8, kind: input, shape index: {}]
  %s9 = inlined_call_operand.vmem [shape: bf16[4,4], index: 9, kind: input, shape index: {}]
  %s10 = inlined_call_operand.vmem [shape: bf16[4,4], index: 10, kind: input, shape index: {}]
  %s11 = inlined_call_operand.vmem [shape: bf16[4,4], index: 11, kind: input, shape index: {}]
  %s12 = inlined_call_operand.vmem [shape: f32[4,1], index: 12, kind: input, shape index: {}]
  %s13 = inlined_call_operand.vmem [shape: f32[1,256], index: 13, kind: input, shape index: {}]
  %s14 = inlined_call_operand.vmem [shape: f32[1,256], index: 14, kind: input, shape index: {}]
  %s15 = inlined_call_operand.vmem [shape: f32[1,256], index: 15, kind: input, shape index: {}]
  %s16 = inlined_call_operand.vmem [shape: f32[1,256], index: 16, kind: input, shape index: {}]
  %s17 = inlined_call_operand.vmem [shape: f32[1,256], index: 17, kind: input, shape index: {}]
  %s18 = inlined_call_operand.vmem [shape: f32[1,256], index: 18, kind: input, shape index: {}]
  %s19 = inlined_call_operand.vmem [shape: f32[4,256], index: 19, kind: input, shape index: {}]
  %s20 = inlined_call_operand.vmem [shape: f32[256,16], index: 20, kind: input, shape index: {}]
  %s21 = inlined_call_operand.<no memory space> [shape: f32[1,1], index: 21, kind: input, shape index: {}]
  %s22 = inlined_call_operand.hbm [shape: f32[1,16], index: 22, kind: output, shape index: {}]
  %s23 = sld [smem:[#allocation0]]
  $region98: #{tpu_custom_call.1} parent=0
    _
  %s25 = ssub.s32 1, %s23
  %s26 = scalar_select 0, %s25, %s23
  %v27 = vstv %s21
  %28 = vst [vmem:[#allocation2] sm:$0x1] %v27
  $region1: #{tpu_custom_call.1} parent=0
    #allocation3 [shape = 'u8[512]{0}', space=vmem, size = 0x400, scoped, tag = 'output window, operand 0, single buffered']
    #allocation4 [shape = 's32[1]{0}', space=sflag, size = 0x4, scoped, tag = 'scoped memory for tpu_custom_call.1']
    %29 = vsyncpa [#allocation4], 0
    // Predicated region
    $region2: #{tpu_custom_call.1} parent=1 // pred_check
      _
    $region3: #{tpu_custom_call.1} parent=1 // pred_check_branch
      %31 = sbr.rel (0) target = $region5
    $region4: #{tpu_custom_call.1} parent=1 // pred_region
      _
    $region5: #{tpu_custom_call.1} parent=1 // pred_fallthru
      _
    // Predicated region
    $region6: #{tpu_custom_call.1} parent=1 // pred_check
      _
    $region7: #{tpu_custom_call.1} parent=1 // pred_check_branch
      %33 = sbr.rel (0) target = $region9
    $region8: #{tpu_custom_call.1} parent=1 // pred_region
      _
    $region9: #{tpu_custom_call.1} parent=1 // pred_fallthru
      _
    // Predicated region
    $region10: #{tpu_custom_call.1} parent=1 // pred_check
      _
    $region11: #{tpu_custom_call.1} parent=1 // pred_check_branch
      %35 = sbr.rel (0) target = $region13
    $region12: #{tpu_custom_call.1} parent=1 // pred_region
      _
    $region13: #{tpu_custom_call.1} parent=1 // pred_fallthru
      _
    // Predicated region
    $region14: #{tpu_custom_call.1} parent=1 // pred_check
      _
    $region15: #{tpu_custom_call.1} parent=1 // pred_check_branch
      %37 = sbr.rel (0) target = $region17
    $region16: #{tpu_custom_call.1} parent=1 // pred_region
      _
    $region17: #{tpu_custom_call.1} parent=1 // pred_fallthru
      _
    // Predicated region
    $region18: #{tpu_custom_call.1} parent=1 // pred_check
      _
    $region19: #{tpu_custom_call.1} parent=1 // pred_check_branch
      %39 = sbr.rel (0) target = $region21
    $region20: #{tpu_custom_call.1} parent=1 // pred_region
      _
    $region21: #{tpu_custom_call.1} parent=1 // pred_fallthru
      _
    // Predicated region
    $region22: #{tpu_custom_call.1} parent=1 // pred_check
      _
    $region23: #{tpu_custom_call.1} parent=1 // pred_check_branch
      %41 = sbr.rel (0) target = $region25
    $region24: #{tpu_custom_call.1} parent=1 // pred_region
      _
    $region25: #{tpu_custom_call.1} parent=1 // pred_fallthru
      _
    // Predicated region
    $region26: #{tpu_custom_call.1} parent=1 // pred_check
      _
    $region27: #{tpu_custom_call.1} parent=1 // pred_check_branch
      %43 = sbr.rel (0) target = $region29
    $region28: #{tpu_custom_call.1} parent=1 // pred_region
      _
    $region29: #{tpu_custom_call.1} parent=1 // pred_fallthru
      _
    // Predicated region
    $region30: #{tpu_custom_call.1} parent=1 // pred_check
      _
    $region31: #{tpu_custom_call.1} parent=1 // pred_check_branch
      %45 = sbr.rel (0) target = $region33
    $region32: #{tpu_custom_call.1} parent=1 // pred_region
      _
    $region33: #{tpu_custom_call.1} parent=1 // pred_fallthru
      _
    // Predicated region
    $region34: #{tpu_custom_call.1} parent=1 // pred_check
      _
    $region35: #{tpu_custom_call.1} parent=1 // pred_check_branch
      %47 = sbr.rel (0) target = $region37
    $region36: #{tpu_custom_call.1} parent=1 // pred_region
      _
    $region37: #{tpu_custom_call.1} parent=1 // pred_fallthru
      _
    // Predicated region
    $region38: #{tpu_custom_call.1} parent=1 // pred_check
      _
    $region39: #{tpu_custom_call.1} parent=1 // pred_check_branch
      %49 = sbr.rel (0) target = $region41
    $region40: #{tpu_custom_call.1} parent=1 // pred_region
      _
    $region41: #{tpu_custom_call.1} parent=1 // pred_fallthru
      _
    // Predicated region
    $region42: #{tpu_custom_call.1} parent=1 // pred_check
      _
    $region43: #{tpu_custom_call.1} parent=1 // pred_check_branch
      %51 = sbr.rel (0) target = $region45
    $region44: #{tpu_custom_call.1} parent=1 // pred_region
      _
    $region45: #{tpu_custom_call.1} parent=1 // pred_fallthru
      _
    // Predicated region
    $region46: #{tpu_custom_call.1} parent=1 // pred_check
      _
    $region47: #{tpu_custom_call.1} parent=1 // pred_check_branch
      %53 = sbr.rel (0) target = $region49
    $region48: #{tpu_custom_call.1} parent=1 // pred_region
      _
    $region49: #{tpu_custom_call.1} parent=1 // pred_fallthru
      _
    // Predicated region
    $region50: #{tpu_custom_call.1} parent=1 // pred_check
      _
    $region51: #{tpu_custom_call.1} parent=1 // pred_check_branch
      %55 = sbr.rel (0) target = $region53
    $region52: #{tpu_custom_call.1} parent=1 // pred_region
      _
    $region53: #{tpu_custom_call.1} parent=1 // pred_fallthru
      _
    // Predicated region
    $region54: #{tpu_custom_call.1} parent=1 // pred_check
      _
    $region55: #{tpu_custom_call.1} parent=1 // pred_check_branch
      %57 = sbr.rel (0) target = $region57
    $region56: #{tpu_custom_call.1} parent=1 // pred_region
      _
    $region57: #{tpu_custom_call.1} parent=1 // pred_fallthru
      _
    // Predicated region
    $region58: #{tpu_custom_call.1} parent=1 // pred_check
      _
    $region59: #{tpu_custom_call.1} parent=1 // pred_check_branch
      %59 = sbr.rel (0) target = $region61
    $region60: #{tpu_custom_call.1} parent=1 // pred_region
      _
    $region61: #{tpu_custom_call.1} parent=1 // pred_fallthru
      _
    // Predicated region
    $region62: #{tpu_custom_call.1} parent=1 // pred_check
      _
    $region63: #{tpu_custom_call.1} parent=1 // pred_check_branch
      %61 = sbr.rel (0) target = $region65
    $region64: #{tpu_custom_call.1} parent=1 // pred_region
      _
    $region65: #{tpu_custom_call.1} parent=1 // pred_fallthru
      _
    // Predicated region
    $region66: #{tpu_custom_call.1} parent=1 // pred_check
      _
    $region67: #{tpu_custom_call.1} parent=1 // pred_check_branch
      %63 = sbr.rel (0) target = $region69
    $region68: #{tpu_custom_call.1} parent=1 // pred_region
      _
    $region69: #{tpu_custom_call.1} parent=1 // pred_fallthru
      _
    // Predicated region
    $region70: #{tpu_custom_call.1} parent=1 // pred_check
      _
    $region71: #{tpu_custom_call.1} parent=1 // pred_check_branch
      %65 = sbr.rel (0) target = $region73
    $region72: #{tpu_custom_call.1} parent=1 // pred_region
      _
    $region73: #{tpu_custom_call.1} parent=1 // pred_fallthru
      _
    // Predicated region
    $region74: #{tpu_custom_call.1} parent=1 // pred_check
      _
    $region75: #{tpu_custom_call.1} parent=1 // pred_check_branch
      %67 = sbr.rel (0) target = $region77
    $region76: #{tpu_custom_call.1} parent=1 // pred_region
      _
    $region77: #{tpu_custom_call.1} parent=1 // pred_fallthru
      _
    // Predicated region
    $region78: #{tpu_custom_call.1} parent=1 // pred_check
      _
    $region79: #{tpu_custom_call.1} parent=1 // pred_check_branch
      %69 = sbr.rel (0) target = $region81
    $region80: #{tpu_custom_call.1} parent=1 // pred_region
      _
    $region81: #{tpu_custom_call.1} parent=1 // pred_fallthru
      _
    // Predicated region
    $region82: #{tpu_custom_call.1} parent=1 // pred_check
      _
    $region83: #{tpu_custom_call.1} parent=1 // pred_check_branch
      %71 = sbr.rel (0) target = $region85
    $region84: #{tpu_custom_call.1} parent=1 // pred_region
      _
    $region85: #{tpu_custom_call.1} parent=1 // pred_fallthru
      _
    // Predicated region
    $region86: #{tpu_custom_call.1} parent=1 // pred_check
      _
    $region87: #{tpu_custom_call.1} parent=1 // pred_check_branch
      %73 = sbr.rel (0) target = $region89
    $region88: #{tpu_custom_call.1} parent=1 // pred_region
      _
    $region89: #{tpu_custom_call.1} parent=1 // pred_fallthru
      _
    %v75 = vld [vmem:[%s0] sm:$0xff]
    %v76 = vld [vmem:[%s0 + $0x8] sm:$0xff]
    %v77 = vld [vmem:[%s0 + $0x10] sm:$0xff]
    %v78 = vld [vmem:[%s0 + $0x18] sm:$0xff]
    %v79 = vld [vmem:[%s13] sm:$0x3]
    %v80 = vld [vmem:[%s14] sm:$0x3]
    %81 = vrot.lane.b32.xlu0 %v75, 1
    %v82 = vpop.permute.xlu0 %81
    %83 = vrot.lane.b32.xlu0 %v77, 1
    %v84 = vpop.permute.xlu0 %83
    %85 = vrot.lane.b32.xlu0 %v76, 1
    %v86 = vpop.permute.xlu0 %85
    %87 = vrot.lane.b32.xlu0 %v78, 1
    %v88 = vpop.permute.xlu0 %87
    %v89 = vlaneseq
    %v90 = vand.u32 %v89, 127
    %vm91 = vcmp.lt.s32.totalorder %v90, 1
    %v92 = vsel %vm91, %v82, %v86
    %v93 = vsel %vm91, %v84, %v88
    %v94 = vsel %vm91, %v86, %v82
    %v95 = vsel %vm91, %v88, %v84
    %v97 = vperm.slane %v79, 0
    %v98 = vperm.slane %v79, 1
    %v101 = vmul.f32 %v94, %v97
    %v102 = vmul.f32 %v92, %v98
    %v103 = vmul.f32 %v95, %v97
    %v104 = vmul.f32 %v93, %v98
    %105 = vrot.lane.b32.xlu0 %v75, 127
    %v106 = vpop.permute.xlu0 %105
    %107 = vrot.lane.b32.xlu0 %v77, 127
    %v108 = vpop.permute.xlu0 %107
    %109 = vrot.lane.b32.xlu0 %v76, 127
    %v110 = vpop.permute.xlu0 %109
    %111 = vrot.lane.b32.xlu0 %v78, 127
    %v112 = vpop.permute.xlu0 %111
    %vm113 = vcmp.lt.s32.totalorder %v90, 127
    %v114 = vsel %vm113, %v106, %v110
    %v115 = vsel %vm113, %v108, %v112
    %v116 = vsel %vm113, %v110, %v106
    %v117 = vsel %vm113, %v112, %v108
    %v119 = vperm.slane %v80, 0
    %v120 = vperm.slane %v80, 1
    %v123 = vmul.f32 %v114, %v119
    %v124 = vmul.f32 %v116, %v120
    %v125 = vmul.f32 %v115, %v119
    %v126 = vmul.f32 %v117, %v120
    %v127 = vld [vmem:[%s2] sm:$0xf]
    %v128 = vpack.c.bf16 %v77, %v75
    %v129 = vpack.c.bf16 %v78, %v76
    %v130 = vld [vmem:[%s1] sm:$0xf]
    %v131 = vpack.c.bf16 %v103, %v101
    %v132 = vpack.c.bf16 %v104, %v102
    %vm133 = vcmask 130048
    %v135 = vsel %vm133, %v130, 0
    %137 = vmatpush.bf16.msra.mxu0 0
    %138 = vmatpush.bf16.msra.mxu0 0
    %139 = vmatpush.bf16.msra.mxu0 0
    %140 = vmatpush.bf16.msra.mxu0 0
    %141 = vmatpush.bf16.msra.mxu0 0
    %142 = vmatpush.bf16.msra.mxu0 0
    %143 = vmatpush.bf16.msra.mxu0 0
    %144 = vmatpush.bf16.msra.mxu0 %v131
    %145 = vmatmul.bf16.gmra.mxu0 %v135
    %v146 = vpop.f32.mrf.mxu0
    %v147 = vadd.f32 0.0, %v146
    %v148 = vpop.f32.mrf.mxu0
    %149 = vdwg.mxu0
    %150 = vmatpush.bf16.msra.mxu0 0
    %151 = vmatpush.bf16.msra.mxu0 0
    %152 = vmatpush.bf16.msra.mxu0 0
    %153 = vmatpush.bf16.msra.mxu0 0
    %154 = vmatpush.bf16.msra.mxu0 0
    %155 = vmatpush.bf16.msra.mxu0 0
    %156 = vmatpush.bf16.msra.mxu0 0
    %157 = vmatpush.bf16.msra.mxu0 %v132
    %158 = vmatmul.bf16.gmra.mxu0 %v135
    %v159 = vpop.f32.mrf.mxu0
    %v160 = vadd.f32 0.0, %v159
    %v161 = vpop.f32.mrf.mxu0
    %162 = vdwg.mxu0
    %v164 = vsel %vm133, %v127, 0
    %166 = vmatpush.bf16.msra.mxu0 0
    %167 = vmatpush.bf16.msra.mxu0 0
    %168 = vmatpush.bf16.msra.mxu0 0
    %169 = vmatpush.bf16.msra.mxu0 0
    %170 = vmatpush.bf16.msra.mxu0 0
    %171 = vmatpush.bf16.msra.mxu0 0
    %172 = vmatpush.bf16.msra.mxu0 0
    %173 = vmatpush.bf16.msra.mxu0 %v128
    %174 = vmatmul.bf16.gmra.mxu0 %v164
    %v175 = vpop.f32.mrf.mxu0
    %v176 = vadd.f32 %v147, %v175
    %v177 = vpop.f32.mrf.mxu0
    %178 = vdwg.mxu0
    %179 = vmatpush.bf16.msra.mxu0 0
    %180 = vmatpush.bf16.msra.mxu0 0
    %181 = vmatpush.bf16.msra.mxu0 0
    %182 = vmatpush.bf16.msra.mxu0 0
    %183 = vmatpush.bf16.msra.mxu0 0
    %184 = vmatpush.bf16.msra.mxu0 0
    %185 = vmatpush.bf16.msra.mxu0 0
    %186 = vmatpush.bf16.msra.mxu0 %v129
    %187 = vmatmul.bf16.gmra.mxu0 %v164
    %v188 = vpop.f32.mrf.mxu0
    %v189 = vadd.f32 %v160, %v188
    %v190 = vpop.f32.mrf.mxu0
    %191 = vdwg.mxu0
    %v192 = vld [vmem:[%s3] sm:$0xf]
    %v193 = vpack.c.bf16 %v125, %v123
    %v194 = vpack.c.bf16 %v126, %v124
    %v196 = vsel %vm133, %v192, 0
    %198 = vmatpush.bf16.msra.mxu0 0
    %199 = vmatpush.bf16.msra.mxu0 0
    %200 = vmatpush.bf16.msra.mxu0 0
    %201 = vmatpush.bf16.msra.mxu0 0
    %202 = vmatpush.bf16.msra.mxu0 0
    %203 = vmatpush.bf16.msra.mxu0 0
    %204 = vmatpush.bf16.msra.mxu0 0
    %205 = vmatpush.bf16.msra.mxu0 %v193
    %206 = vmatmul.bf16.gmra.mxu0 %v196
    %v207 = vpop.f32.mrf.mxu0
    %v208 = vadd.f32 0.0, %v207
    %v209 = vpop.f32.mrf.mxu0
    %210 = vdwg.mxu0
    %211 = vmatpush.bf16.msra.mxu0 0
    %212 = vmatpush.bf16.msra.mxu0 0
    %213 = vmatpush.bf16.msra.mxu0 0
    %214 = vmatpush.bf16.msra.mxu0 0
    %215 = vmatpush.bf16.msra.mxu0 0
    %216 = vmatpush.bf16.msra.mxu0 0
    %217 = vmatpush.bf16.msra.mxu0 0
    %218 = vmatpush.bf16.msra.mxu0 %v194
    %219 = vmatmul.bf16.gmra.mxu0 %v196
    %v220 = vpop.f32.mrf.mxu0
    %v221 = vadd.f32 0.0, %v220
    %v222 = vpop.f32.mrf.mxu0
    %223 = vdwg.mxu0
    %v224 = vadd.f32 %v176, %v208
    %v225 = vadd.f32 %v189, %v221
    %v226 = vld [vmem:[%s4] sm:$0xff]
    %228 = vset.pattern.permute.xlu0 0
    %229 = vperm.xlu0 %228, %v226
    %v230 = vpop.permute.xlu0 %229
    %v232 = vadd.f32 %v224, %v230
    %v233 = vadd.f32 %v225, %v230
    %v234 = vmul.f32 %v232, 0.1
    %v235 = vmul.f32 %v233, 0.1
    %v236 = vmax.f32 %v232, %v234
    %v237 = vmax.f32 %v233, %v235
    %238 = vrot.lane.b32.xlu0 %v236, 127
    %v239 = vpop.permute.xlu0 %238
    %240 = vrot.lane.b32.xlu0 %v237, 127
    %v241 = vpop.permute.xlu0 %240
    %v242 = vsel %vm113, %v239, %v241
    %v243 = vsel %vm113, %v241, %v239
    %v244 = vmax.f32 %v236, %v242
    %v245 = vmax.f32 %v237, %v243
    %v246 = vld [vmem:[%s15] sm:$0x3]
    %v247 = vld [vmem:[%s16] sm:$0x3]
    %248 = vrot.lane.b32.xlu0 %v244, 2
    %v249 = vpop.permute.xlu0 %248
    %250 = vrot.lane.b32.xlu0 %v245, 2
    %v251 = vpop.permute.xlu0 %250
    %vm252 = vcmp.lt.s32.totalorder %v90, 2
    %v253 = vsel %vm252, %v249, %v251
    %v254 = vsel %vm252, %v251, %v249
    %v256 = vperm.slane %v246, 0
    %v257 = vperm.slane %v246, 1
    %v260 = vmul.f32 %v254, %v256
    %v261 = vmul.f32 %v253, %v257
    %262 = vrot.lane.b32.xlu0 %v244, 126
    %v263 = vpop.permute.xlu0 %262
    %264 = vrot.lane.b32.xlu0 %v245, 126
    %v265 = vpop.permute.xlu0 %264
    %vm266 = vcmp.lt.s32.totalorder %v90, 126
    %v267 = vsel %vm266, %v263, %v265
    %v268 = vsel %vm266, %v265, %v263
    %v270 = vperm.slane %v247, 0
    %v271 = vperm.slane %v247, 1
    %v274 = vmul.f32 %v267, %v270
    %v275 = vmul.f32 %v268, %v271
    %v276 = vld [vmem:[%s6] sm:$0x3]
    %v277 = vpack.c.bf16 %v244, %v244
    %v278 = vpack.c.bf16 %v245, %v245
    %v279 = vld [vmem:[%s5] sm:$0x3]
    %v280 = vpack.c.bf16 %v260, %v260
    %v281 = vpack.c.bf16 %v261, %v261
    %vm282 = vcmask 64512
    %v284 = vsel %vm282, %v279, 0
    %vm286 = vcmask 1043456
    %v288 = vsel %vm286, %v280, 0
    %v291 = vsel %vm286, %v281, 0
    %293 = vmatpush.bf16.msra.mxu0 0
    %294 = vmatpush.bf16.msra.mxu0 0
    %295 = vmatpush.bf16.msra.mxu0 0
    %296 = vmatpush.bf16.msra.mxu0 0
    %297 = vmatpush.bf16.msra.mxu0 0
    %298 = vmatpush.bf16.msra.mxu0 0
    %299 = vmatpush.bf16.msra.mxu0 0
    %300 = vmatpush.bf16.msra.mxu0 %v288
    %301 = vmatmul.bf16.gmra.mxu0 %v284
    %v302 = vpop.f32.mrf.mxu0
    %v303 = vadd.f32 0.0, %v302
    %v304 = vpop.f32.mrf.mxu0
    %305 = vdwg.mxu0
    %306 = vmatpush.bf16.msra.mxu0 0
    %307 = vmatpush.bf16.msra.mxu0 0
    %308 = vmatpush.bf16.msra.mxu0 0
    %309 = vmatpush.bf16.msra.mxu0 0
    %310 = vmatpush.bf16.msra.mxu0 0
    %311 = vmatpush.bf16.msra.mxu0 0
    %312 = vmatpush.bf16.msra.mxu0 0
    %313 = vmatpush.bf16.msra.mxu0 %v291
    %314 = vmatmul.bf16.gmra.mxu0 %v284
    %v315 = vpop.f32.mrf.mxu0
    %v316 = vadd.f32 0.0, %v315
    %v317 = vpop.f32.mrf.mxu0
    %318 = vdwg.mxu0
    %v320 = vsel %vm282, %v276, 0
    %v323 = vsel %vm286, %v277, 0
    %v326 = vsel %vm286, %v278, 0
    %328 = vmatpush.bf16.msra.mxu0 0
    %329 = vmatpush.bf16.msra.mxu0 0
    %330 = vmatpush.bf16.msra.mxu0 0
    %331 = vmatpush.bf16.msra.mxu0 0
    %332 = vmatpush.bf16.msra.mxu0 0
    %333 = vmatpush.bf16.msra.mxu0 0
    %334 = vmatpush.bf16.msra.mxu0 0
    %335 = vmatpush.bf16.msra.mxu0 %v323
    %336 = vmatmul.bf16.gmra.mxu0 %v320
    %v337 = vpop.f32.mrf.mxu0
    %v338 = vadd.f32 %v303, %v337
    %v339 = vpop.f32.mrf.mxu0
    %340 = vdwg.mxu0
    %341 = vmatpush.bf16.msra.mxu0 0
    %342 = vmatpush.bf16.msra.mxu0 0
    %343 = vmatpush.bf16.msra.mxu0 0
    %344 = vmatpush.bf16.msra.mxu0 0
    %345 = vmatpush.bf16.msra.mxu0 0
    %346 = vmatpush.bf16.msra.mxu0 0
    %347 = vmatpush.bf16.msra.mxu0 0
    %348 = vmatpush.bf16.msra.mxu0 %v326
    %349 = vmatmul.bf16.gmra.mxu0 %v320
    %v350 = vpop.f32.mrf.mxu0
    %v351 = vadd.f32 %v316, %v350
    %v352 = vpop.f32.mrf.mxu0
    %353 = vdwg.mxu0
    %v354 = vld [vmem:[%s7] sm:$0x3]
    %v355 = vpack.c.bf16 %v274, %v274
    %v356 = vpack.c.bf16 %v275, %v275
    %v358 = vsel %vm282, %v354, 0
    %v361 = vsel %vm286, %v355, 0
    %v364 = vsel %vm286, %v356, 0
    %366 = vmatpush.bf16.msra.mxu0 0
    %367 = vmatpush.bf16.msra.mxu0 0
    %368 = vmatpush.bf16.msra.mxu0 0
    %369 = vmatpush.bf16.msra.mxu0 0
    %370 = vmatpush.bf16.msra.mxu0 0
    %371 = vmatpush.bf16.msra.mxu0 0
    %372 = vmatpush.bf16.msra.mxu0 0
    %373 = vmatpush.bf16.msra.mxu0 %v361
    %374 = vmatmul.bf16.gmra.mxu0 %v358
    %v375 = vpop.f32.mrf.mxu0
    %v376 = vadd.f32 0.0, %v375
    %v377 = vpop.f32.mrf.mxu0
    %378 = vdwg.mxu0
    %379 = vmatpush.bf16.msra.mxu0 0
    %380 = vmatpush.bf16.msra.mxu0 0
    %381 = vmatpush.bf16.msra.mxu0 0
    %382 = vmatpush.bf16.msra.mxu0 0
    %383 = vmatpush.bf16.msra.mxu0 0
    %384 = vmatpush.bf16.msra.mxu0 0
    %385 = vmatpush.bf16.msra.mxu0 0
    %386 = vmatpush.bf16.msra.mxu0 %v364
    %387 = vmatmul.bf16.gmra.mxu0 %v358
    %v388 = vpop.f32.mrf.mxu0
    %v389 = vadd.f32 0.0, %v388
    %v390 = vpop.f32.mrf.mxu0
    %391 = vdwg.mxu0
    %v392 = vadd.f32 %v338, %v376
    %v393 = vadd.f32 %v351, %v389
    %v394 = vld [vmem:[%s8] sm:$0xf]
    %396 = vset.pattern.permute.xlu0 0
    %397 = vperm.xlu0 %396, %v394
    %v398 = vpop.permute.xlu0 %397
    %v400 = vadd.f32 %v392, %v398
    %v401 = vadd.f32 %v393, %v398
    %v402 = vmul.f32 %v400, 0.1
    %v403 = vmul.f32 %v401, 0.1
    %v404 = vmax.f32 %v400, %v402
    %v405 = vmax.f32 %v401, %v403
    %406 = vrot.lane.b32.xlu0 %v404, 126
    %v407 = vpop.permute.xlu0 %406
    %408 = vrot.lane.b32.xlu0 %v405, 126
    %v409 = vpop.permute.xlu0 %408
    %v410 = vsel %vm266, %v407, %v409
    %v411 = vsel %vm266, %v409, %v407
    %v412 = vmax.f32 %v404, %v410
    %v413 = vmax.f32 %v405, %v411
    %v414 = vld [vmem:[%s17] sm:$0x3]
    %v415 = vld [vmem:[%s18] sm:$0x3]
    %416 = vrot.lane.b32.xlu0 %v412, 4
    %v417 = vpop.permute.xlu0 %416
    %418 = vrot.lane.b32.xlu0 %v413, 4
    %v419 = vpop.permute.xlu0 %418
    %vm420 = vcmp.lt.s32.totalorder %v90, 4
    %v421 = vsel %vm420, %v417, %v419
    %v422 = vsel %vm420, %v419, %v417
    %v424 = vperm.slane %v414, 0
    %v425 = vperm.slane %v414, 1
    %v428 = vmul.f32 %v422, %v424
    %v429 = vmul.f32 %v421, %v425
    %430 = vrot.lane.b32.xlu0 %v412, 124
    %v431 = vpop.permute.xlu0 %430
    %432 = vrot.lane.b32.xlu0 %v413, 124
    %v433 = vpop.permute.xlu0 %432
    %vm434 = vcmp.lt.s32.totalorder %v90, 124
    %v435 = vsel %vm434, %v431, %v433
    %v436 = vsel %vm434, %v433, %v431
    %v438 = vperm.slane %v415, 0
    %v439 = vperm.slane %v415, 1
    %v442 = vmul.f32 %v435, %v438
    %v443 = vmul.f32 %v436, %v439
    %v444 = vld [vmem:[%s10] sm:$0x3]
    %v445 = vpack.c.bf16 %v412, %v412
    %v446 = vpack.c.bf16 %v413, %v413
    %v447 = vld [vmem:[%s9] sm:$0x3]
    %v448 = vpack.c.bf16 %v428, %v428
    %v449 = vpack.c.bf16 %v429, %v429
    %vm450 = vcmask 31744
    %v452 = vsel %vm450, %v447, 0
    %vm454 = vcmask 1041408
    %v456 = vsel %vm454, %v448, 0
    %v459 = vsel %vm454, %v449, 0
    %461 = vmatpush.bf16.msra.mxu0 0
    %462 = vmatpush.bf16.msra.mxu0 0
    %463 = vmatpush.bf16.msra.mxu0 0
    %464 = vmatpush.bf16.msra.mxu0 0
    %465 = vmatpush.bf16.msra.mxu0 0
    %466 = vmatpush.bf16.msra.mxu0 0
    %467 = vmatpush.bf16.msra.mxu0 0
    %468 = vmatpush.bf16.msra.mxu0 %v456
    %469 = vmatmul.bf16.gmra.mxu0 %v452
    %v470 = vpop.f32.mrf.mxu0
    %v471 = vadd.f32 0.0, %v470
    %v472 = vpop.f32.mrf.mxu0
    %473 = vdwg.mxu0
    %474 = vmatpush.bf16.msra.mxu0 0
    %475 = vmatpush.bf16.msra.mxu0 0
    %476 = vmatpush.bf16.msra.mxu0 0
    %477 = vmatpush.bf16.msra.mxu0 0
    %478 = vmatpush.bf16.msra.mxu0 0
    %479 = vmatpush.bf16.msra.mxu0 0
    %480 = vmatpush.bf16.msra.mxu0 0
    %481 = vmatpush.bf16.msra.mxu0 %v459
    %482 = vmatmul.bf16.gmra.mxu0 %v452
    %v483 = vpop.f32.mrf.mxu0
    %v484 = vadd.f32 0.0, %v483
    %v485 = vpop.f32.mrf.mxu0
    %486 = vdwg.mxu0
    %v488 = vsel %vm450, %v444, 0
    %v491 = vsel %vm454, %v445, 0
    %v494 = vsel %vm454, %v446, 0
    %496 = vmatpush.bf16.msra.mxu0 0
    %497 = vmatpush.bf16.msra.mxu0 0
    %498 = vmatpush.bf16.msra.mxu0 0
    %499 = vmatpush.bf16.msra.mxu0 0
    %500 = vmatpush.bf16.msra.mxu0 0
    %501 = vmatpush.bf16.msra.mxu0 0
    %502 = vmatpush.bf16.msra.mxu0 0
    %503 = vmatpush.bf16.msra.mxu0 %v491
    %504 = vmatmul.bf16.gmra.mxu0 %v488
    %v505 = vpop.f32.mrf.mxu0
    %v506 = vadd.f32 %v471, %v505
    %v507 = vpop.f32.mrf.mxu0
    %508 = vdwg.mxu0
    %509 = vmatpush.bf16.msra.mxu0 0
    %510 = vmatpush.bf16.msra.mxu0 0
    %511 = vmatpush.bf16.msra.mxu0 0
    %512 = vmatpush.bf16.msra.mxu0 0
    %513 = vmatpush.bf16.msra.mxu0 0
    %514 = vmatpush.bf16.msra.mxu0 0
    %515 = vmatpush.bf16.msra.mxu0 0
    %516 = vmatpush.bf16.msra.mxu0 %v494
    %517 = vmatmul.bf16.gmra.mxu0 %v488
    %v518 = vpop.f32.mrf.mxu0
    %v519 = vadd.f32 %v484, %v518
    %v520 = vpop.f32.mrf.mxu0
    %521 = vdwg.mxu0
    %v522 = vld [vmem:[%s11] sm:$0x3]
    %v523 = vpack.c.bf16 %v442, %v442
    %v524 = vpack.c.bf16 %v443, %v443
    %v526 = vsel %vm450, %v522, 0
    %v529 = vsel %vm454, %v523, 0
    %v532 = vsel %vm454, %v524, 0
    %534 = vmatpush.bf16.msra.mxu0 0
    %535 = vmatpush.bf16.msra.mxu0 0
    %536 = vmatpush.bf16.msra.mxu0 0
    %537 = vmatpush.bf16.msra.mxu0 0
    %538 = vmatpush.bf16.msra.mxu0 0
    %539 = vmatpush.bf16.msra.mxu0 0
    %540 = vmatpush.bf16.msra.mxu0 0
    %541 = vmatpush.bf16.msra.mxu0 %v529
    %542 = vmatmul.bf16.gmra.mxu0 %v526
    %v543 = vpop.f32.mrf.mxu0
    %v544 = vadd.f32 0.0, %v543
    %v545 = vpop.f32.mrf.mxu0
    %546 = vdwg.mxu0
    %547 = vmatpush.bf16.msra.mxu0 0
    %548 = vmatpush.bf16.msra.mxu0 0
    %549 = vmatpush.bf16.msra.mxu0 0
    %550 = vmatpush.bf16.msra.mxu0 0
    %551 = vmatpush.bf16.msra.mxu0 0
    %552 = vmatpush.bf16.msra.mxu0 0
    %553 = vmatpush.bf16.msra.mxu0 0
    %554 = vmatpush.bf16.msra.mxu0 %v532
    %555 = vmatmul.bf16.gmra.mxu0 %v526
    %v556 = vpop.f32.mrf.mxu0
    %v557 = vadd.f32 0.0, %v556
    %v558 = vpop.f32.mrf.mxu0
    %559 = vdwg.mxu0
    %v560 = vadd.f32 %v506, %v544
    %v561 = vadd.f32 %v519, %v557
    %v562 = vld [vmem:[%s12] sm:$0xf]
    %564 = vset.pattern.permute.xlu0 0
    %565 = vperm.xlu0 %564, %v562
    %v566 = vpop.permute.xlu0 %565
    %v568 = vadd.f32 %v560, %v566
    %v569 = vadd.f32 %v561, %v566
    %v570 = vmul.f32 %v568, 0.1
    %v571 = vmul.f32 %v569, 0.1
    %v572 = vmax.f32 %v568, %v570
    %v573 = vmax.f32 %v569, %v571
    %v574 = vld [vmem:[%s19] sm:$0xff]
    %576 = vst [vmem:[#allocation1] ss:$2 sm:$0xff] %v574
    %v577 = vld.sshfl [vmem:[#allocation1] sm:$0xff pattern:$0x75316420]
    %v578 = vld.sshfl [vmem:[#allocation1 + $0x8] sm:$0xff pattern:$0x75316420]
    %v581 = vmul.f32 %v572, %v577
    %v582 = vmul.f32 %v573, %v578
    %v583 = vsel %vm286, %v581, 0.0
    %v584 = vrot.slane %v583, 4
    %v585 = vadd.f32 %v583, %v584
    %v586 = vrot.slane %v585, 2
    %v587 = vadd.f32 %v585, %v586
    %v588 = vrot.slane %v587, 1
    %v589 = vadd.f32 %v587, %v588
    %v590 = vsel %vm286, %v582, 0.0
    %v591 = vrot.slane %v590, 4
    %v592 = vadd.f32 %v590, %v591
    %v593 = vrot.slane %v592, 2
    %v594 = vadd.f32 %v592, %v593
    %v595 = vrot.slane %v594, 1
    %v596 = vadd.f32 %v594, %v595
    %v597 = vld [vmem:[%s20] sm:$0xff]
    %v598 = vld [vmem:[%s20 + $0x8] sm:$0xff]
    %v599 = vld [vmem:[%s20 + $0x10] sm:$0xff]
    %v600 = vld [vmem:[%s20 + $0x18] sm:$0xff]
    %v601 = vld [vmem:[%s20 + $0x20] sm:$0xff]
    %v602 = vld [vmem:[%s20 + $0x28] sm:$0xff]
    %v603 = vld [vmem:[%s20 + $0x30] sm:$0xff]
    %v604 = vld [vmem:[%s20 + $0x38] sm:$0xff]
    %v605 = vld [vmem:[%s20 + $0x40] sm:$0xff]
    %v606 = vld [vmem:[%s20 + $0x48] sm:$0xff]
    %v607 = vld [vmem:[%s20 + $0x50] sm:$0xff]
    %v608 = vld [vmem:[%s20 + $0x58] sm:$0xff]
    %v609 = vld [vmem:[%s20 + $0x60] sm:$0xff]
    %v610 = vld [vmem:[%s20 + $0x68] sm:$0xff]
    %v611 = vld [vmem:[%s20 + $0x70] sm:$0xff]
    %v612 = vld [vmem:[%s20 + $0x78] sm:$0xff]
    %v613 = vld [vmem:[%s20 + $0x80] sm:$0xff]
    %v614 = vld [vmem:[%s20 + $0x88] sm:$0xff]
    %v615 = vld [vmem:[%s20 + $0x90] sm:$0xff]
    %v616 = vld [vmem:[%s20 + $0x98] sm:$0xff]
    %v617 = vld [vmem:[%s20 + $0xa0] sm:$0xff]
    %v618 = vld [vmem:[%s20 + $0xa8] sm:$0xff]
    %v619 = vld [vmem:[%s20 + $0xb0] sm:$0xff]
    %v620 = vld [vmem:[%s20 + $0xb8] sm:$0xff]
    %v621 = vld [vmem:[%s20 + $0xc0] sm:$0xff]
    %v622 = vld [vmem:[%s20 + $0xc8] sm:$0xff]
    %v623 = vld [vmem:[%s20 + $0xd0] sm:$0xff]
    %v624 = vld [vmem:[%s20 + $0xd8] sm:$0xff]
    %v625 = vld [vmem:[%s20 + $0xe0] sm:$0xff]
    %v626 = vld [vmem:[%s20 + $0xe8] sm:$0xff]
    %v627 = vld [vmem:[%s20 + $0xf0] sm:$0xff]
    %v628 = vld [vmem:[%s20 + $0xf8] sm:$0xff]
    %v629 = vld [vmem:[#allocation2] sm:$0x1]
    %631 = vset.pattern.permute.xlu0 0
    %632 = vperm.xlu0 %631, %v629
    %v633 = vpop.permute.xlu0 %632
    %v635 = vperm.slane %v633, 0
    %636 = vmatpush.msra.mxu0 %v612
    %637 = vmatpush.msra.mxu0 %v611
    %638 = vmatpush.msra.mxu0 %v610
    %639 = vmatpush.msra.mxu0 %v609
    %640 = vmatpush.msra.mxu0 %v608
    %641 = vmatpush.msra.mxu0 %v607
    %642 = vmatpush.msra.mxu0 %v606
    %643 = vmatpush.msra.mxu0 %v605
    %644 = vmatpush.msra.mxu0 %v604
    %645 = vmatpush.msra.mxu0 %v603
    %646 = vmatpush.msra.mxu0 %v602
    %647 = vmatpush.msra.mxu0 %v601
    %648 = vmatpush.msra.mxu0 %v600
    %649 = vmatpush.msra.mxu0 %v599
    %650 = vmatpush.msra.mxu0 %v598
    %651 = vmatpush.msra.mxu0 %v597
    %652 = vmatmul.f32.gmra.mxu0 %v589
    %v653 = vpop.f32.mrf.mxu0
    %v654 = vadd.f32 %v635, %v653
    %655 = vdwg.mxu0
    %656 = vmatpush.msra.mxu0 %v628
    %657 = vmatpush.msra.mxu0 %v627
    %658 = vmatpush.msra.mxu0 %v626
    %659 = vmatpush.msra.mxu0 %v625
    %660 = vmatpush.msra.mxu0 %v624
    %661 = vmatpush.msra.mxu0 %v623
    %662 = vmatpush.msra.mxu0 %v622
    %663 = vmatpush.msra.mxu0 %v621
    %664 = vmatpush.msra.mxu0 %v620
    %665 = vmatpush.msra.mxu0 %v619
    %666 = vmatpush.msra.mxu0 %v618
    %667 = vmatpush.msra.mxu0 %v617
    %668 = vmatpush.msra.mxu0 %v616
    %669 = vmatpush.msra.mxu0 %v615
    %670 = vmatpush.msra.mxu0 %v614
    %671 = vmatpush.msra.mxu0 %v613
    %672 = vmatmul.f32.gmra.mxu0 %v596
    %v673 = vpop.f32.mrf.mxu0
    %v674 = vadd.f32 %v654, %v673
    %675 = vdwg.mxu0
    %vm676 = vcmask 122880
    %677 = vst.msk [vmem:[#allocation3] sm:$0x1] %vm676, %v674
    // Predicated region
    $region90: #{tpu_custom_call.1} parent=1 // pred_check
      _
    $region91: #{tpu_custom_call.1} parent=1 // pred_check_branch
      %679 = sbr.rel (0) target = $region93
    $region92: #{tpu_custom_call.1} parent=1 // pred_region
      %681 = vsyncadd [#allocation4], 0
      %s683 = sshll.u32 [#allocation3], 4
      %s684 = int_to_ptr.vmem [resolvable:$true] %s683
      %s685 = sshll.u32 %s22, 4
      %s686 = int_to_ptr.hbm [resolvable:$true] %s685
      %688 = dma.vmem_to_hbm [thread:$0]  %s684, 16, %s686, [#allocation4]
    $region93: #{tpu_custom_call.1} parent=1 // pred_fallthru
      _
    // Predicated region
    $region94: #{tpu_custom_call.1} parent=1 // pred_check
      _
    $region95: #{tpu_custom_call.1} parent=1 // pred_check_branch
      %690 = sbr.rel (0) target = $region97
    $region96: #{tpu_custom_call.1} parent=1 // pred_region
      %692 = dma.done [#allocation4], 16
    $region97: #{tpu_custom_call.1} parent=1 // pred_fallthru
      _
    %693 = vsyncpa [#allocation4], 1

</llo_original>
